<compile_context>
chip_gen: v5e
topology: v5e:2x2
jax: 0.10.0
libtpu: 0.0.40
codegen_flags: <defaults>
</compile_context>

<pallas_src>
import jax
import jax.numpy as jnp
import numpy as np
from jax.experimental import pallas as pl
from jax.experimental.pallas import tpu as pltpu


def _dropout1d_kernel(m_ref, x_ref, o_ref):
    # m_ref: (TR, 1) fused keep * 1/(1-p) multiplier; x_ref / o_ref: (TR, TL).
    o_ref[...] = (x_ref[...] * m_ref[...]).astype(o_ref.dtype)


def _round_up(v, m):
    return ((v + m - 1) // m) * m


def _pick_tile(dim, align, target):
    """Largest multiple of `align` <= target that divides `dim` (dim % align == 0)."""
    target = max(align, min(target, dim))
    t = (target // align) * align
    while t > align and dim % t != 0:
        t -= align
    return t


def dropout1d(x, seed, p=0.1, training=True):
    """Channel-wise Dropout1d over (N, C, L): one Bernoulli draw per (n, c) row."""
    if not (0.0 <= p <= 1.0):
        raise ValueError(f"dropout probability must be in [0, 1], got {p}")
    if not training or p == 0.0:
        return x
    if p >= 1.0:
        # Every channel dropped; avoid the 1/(1-p) divide-by-zero.
        return jnp.zeros_like(x)

    N, C, L = x.shape
    rows = N * C
    itemsize = jnp.dtype(x.dtype).itemsize
    row_align = {4: 8, 2: 16, 1: 32}.get(itemsize, 8)

    # Pad to hardware tiling: rows -> sublane packing, L -> 128 lanes.
    rows_p = _round_up(rows, row_align)
    L_p = _round_up(L, 128)

    x2 = x.reshape(rows, L)
    if (rows_p, L_p) != (rows, L):
        x2 = jnp.pad(x2, ((0, rows_p - rows), (0, L_p - L)))

    # Per-(n, c) keep/scale multiplier, drawn once.
    # TODO(synk): callers must thread a fresh `seed` each forward to mimic
    # PyTorch's stateful RNG (reusing a seed reproduces the same mask).
    key = jax.random.PRNGKey(seed)
    keep = jax.random.bernoulli(key, 1.0 - p, (rows_p, 1))
    mult_dtype = x.dtype if itemsize == 2 else jnp.float32
    mult = jnp.where(keep, 1.0 / (1.0 - p), 0.0).astype(mult_dtype)
    m_itemsize = jnp.dtype(mult_dtype).itemsize

    # --- Tile sizing: amortize the ~0.35 us per-grid-step pipeline overhead.
    X_BLOCK_BUDGET = 8 * 1024 * 1024     # per x/out block
    TOTAL_BUDGET = 36 * 1024 * 1024      # all double-buffered blocks together

    # Grow the lane axis first (contiguous row-major HBM bursts per DMA).
    tl_cap = max(128, (X_BLOCK_BUDGET // (row_align * itemsize)) // 128 * 128)
    TL = _pick_tile(L_p, 128, tl_cap)

    # Per row of a block: 2x double-buffered (x + out) tiles plus the
    # (TR, 1) multiplier tile padded to 128 lanes, double buffered.
    per_row_bytes = 4 * TL * itemsize + 2 * 128 * m_itemsize
    max_rows = max(row_align, TOTAL_BUDGET // per_row_bytes)
    TR = _pick_tile(rows_p, row_align, max_rows)

    vmem_bytes = int(TR * per_row_bytes + (4 << 20))  # + headroom for internal scratch

    grid = (rows_p // TR, L_p // TL)

    out2 = pl.pallas_call(
        _dropout1d_kernel,
        out_shape=jax.ShapeDtypeStruct((rows_p, L_p), x.dtype),
        grid=grid,
        in_specs=[
            pl.BlockSpec((TR, 1), lambda r, l: (r, 0)),    # multiplier (rows, 1)
            pl.BlockSpec((TR, TL), lambda r, l: (r, l)),   # x
        ],
        out_specs=pl.BlockSpec((TR, TL), lambda r, l: (r, l)),
        compiler_params=pltpu.CompilerParams(
            dimension_semantics=("parallel", "parallel"),
            vmem_limit_bytes=vmem_bytes,
        ),
        cost_estimate=pl.CostEstimate(
            flops=rows_p * L_p,
            transcendentals=0,
            bytes_accessed=2 * rows_p * L_p * itemsize + rows_p * m_itemsize,
        ),
    )(mult, x2)

    if (rows_p, L_p) != (rows, L):
        out2 = out2[:rows, :L]
    return out2.reshape(N, C, L)


if __name__ == "__main__":
    p = 0.1
    scale = 1.0 / (1.0 - p)

    key = jax.random.PRNGKey(0)
    k1, k2 = jax.random.split(key)

    # Lane-aligned case.
    N, C, L = 2, 4, 256
    x = jax.random.normal(k1, (N, C, L), dtype=jnp.float32)
    out = jax.block_until_ready(dropout1d(x, seed=1234, p=p, training=True))
    x_np, out_np = np.asarray(x), np.asarray(out)
    for n in range(N):
        for c in range(C):
            row = out_np[n, c]
            ok = np.allclose(row, 0.0) or np.allclose(
                row, x_np[n, c] * scale, rtol=1e-6, atol=1e-6)
            assert ok, f"row ({n},{c}) is neither dropped nor kept"

    # Unaligned rows / L exercises the padding path (no masked partial stores).
    N2, C2, L2 = 2, 3, 200
    xb = jax.random.normal(k2, (N2, C2, L2), dtype=jnp.float32)
    outb = jax.block_until_ready(dropout1d(xb, seed=7, p=p, training=True))
    assert outb.shape == (N2, C2, L2)
    xb_np, outb_np = np.asarray(xb), np.asarray(outb)
    for n in range(N2):
        for c in range(C2):
            row = outb_np[n, c]
            ok = np.allclose(row, 0.0) or np.allclose(
                row, xb_np[n, c] * scale, rtol=1e-6, atol=1e-6)
            assert ok, f"row ({n},{c}) is neither dropped nor kept (padded path)"

    # Eval mode / p == 0 are identity; p == 1 is all-zero.
    assert np.allclose(np.asarray(dropout1d(x, seed=1, p=p, training=False)), x_np)
    assert np.allclose(np.asarray(dropout1d(x, seed=1, p=0.0, training=True)), x_np)
    assert np.allclose(np.asarray(dropout1d(x, seed=1, p=1.0, training=True)), 0.0)

    print("KERNEL_OK")
</pallas_src>

<mosaic_0001>
module attributes {stable_mosaic.version = 11 : i64} {
  func.func @_dropout1d_kernel(%arg0: i32, %arg1: i32, %arg2: memref<8x1xf32, #tpu.memory_space<vmem>>, %arg3: memref<8x256xf32, #tpu.memory_space<vmem>>, %arg4: memref<8x256xf32, #tpu.memory_space<vmem>>) attributes {dimension_semantics = [#tpu.dimension_semantics<parallel>, #tpu.dimension_semantics<parallel>], iteration_bounds = array<i64: 1, 1>, scalar_prefetch = 0 : i64, scratch_operands = 0 : i64, tpu.core_type = #tpu.core_type<tc>, window_params = [{transform_indices = @transform_0, window_bounds = array<i64: 8, 1>}, {transform_indices = @transform_1, window_bounds = array<i64: 8, 256>}, {transform_indices = @transform_2, window_bounds = array<i64: 8, 256>}]} {
    %c0 = arith.constant 0 : index
    %c0_0 = arith.constant 0 : index
    %0 = vector.load %arg3[%c0, %c0_0] : memref<8x256xf32, #tpu.memory_space<vmem>>, vector<8x256xf32>
    %c0_1 = arith.constant 0 : index
    %c0_2 = arith.constant 0 : index
    %1 = vector.load %arg2[%c0_1, %c0_2] : memref<8x1xf32, #tpu.memory_space<vmem>>, vector<8x1xf32>
    %2 = vector.broadcast %1 : vector<8x1xf32> to vector<8x256xf32>
    %3 = arith.mulf %0, %2 : vector<8x256xf32>
    %c0_3 = arith.constant 0 : index
    %c0_4 = arith.constant 0 : index
    %4 = vector.load %arg4[%c0_3, %c0_4] : memref<8x256xf32, #tpu.memory_space<vmem>>, vector<8x256xf32>
    tpu.vector_store %arg4[%c0_3, %c0_4], %3 {strides = array<i32>} : memref<8x256xf32, #tpu.memory_space<vmem>>, vector<8x256xf32>,
    return
  }
  func.func @transform_0(%arg0: i32, %arg1: i32) -> (i32, i32) {
    %c0_i32 = arith.constant 0 : i32
    %c0_i32_0 = arith.constant 0 : i32
    return %arg0, %c0_i32 : i32, i32
  }
  func.func @transform_1(%arg0: i32, %arg1: i32) -> (i32, i32) {
    %c0_i32 = arith.constant 0 : i32
    return %arg0, %arg1 : i32, i32
  }
  func.func @transform_2(%arg0: i32, %arg1: i32) -> (i32, i32) {
    %c0_i32 = arith.constant 0 : i32
    return %arg0, %arg1 : i32, i32
  }
}

</mosaic_0001>

<llo_original>
// kernel: tpu_custom_call.1
$region0: #{tpu_custom_call.1}
  #allocation0 [shape = 'u32[]', space=smem, size = 0x4, offset = 0x4, fixed_abs, tag = 'smem constant byte address 0x4 - core index']
  #allocation1 [shape = 'u32[72,128]{1,0:T(1,128)}', space=vmem, size = 0x9000, scoped, tag = 'internal scratch']
  %s0 = inlined_call_operand.vmem [shape: f32[8,1], index: 0, kind: input, shape index: {}]
  %s1 = inlined_call_operand.hbm [shape: f32[8,256], index: 1, kind: input, shape index: {}]
  %s2 = inlined_call_operand.hbm [shape: f32[8,256], index: 2, kind: output, shape index: {}]
  %s3 = sld [smem:[#allocation0]]
  $region22: #{tpu_custom_call.1} parent=0
    _
  %s5 = ssub.s32 1, %s3
  %s6 = scalar_select 0, %s5, %s3
  $region1: #{tpu_custom_call.1} parent=0
    #allocation2 [shape = 'u8[8192]{0}', space=vmem, size = 0x2000, scoped, tag = 'input window, operand 1, single buffered']
    #allocation3 [shape = 's32[1]{0}', space=sflag, size = 0x4, scoped, tag = 'scoped memory for tpu_custom_call.1']
    #allocation4 [shape = 's32[1]{0}', space=sflag, size = 0x4, scoped, tag = 'scoped memory for tpu_custom_call.1']
    #allocation5 [shape = 'u8[8192]{0}', space=vmem, size = 0x2000, scoped, tag = 'output window, operand 0, single buffered']
    %7 = vsyncpa [#allocation3], 0
    %8 = vsyncpa [#allocation4], 0
    // Predicated region
    $region2: #{tpu_custom_call.1} parent=1 // pred_check
      _
    $region3: #{tpu_custom_call.1} parent=1 // pred_check_branch
      %10 = sbr.rel (0) target = $region5
    $region4: #{tpu_custom_call.1} parent=1 // pred_region
      _
    $region5: #{tpu_custom_call.1} parent=1 // pred_fallthru
      _
    // Predicated region
    $region6: #{tpu_custom_call.1} parent=1 // pred_check
      _
    $region7: #{tpu_custom_call.1} parent=1 // pred_check_branch
      %12 = sbr.rel (0) target = $region9
    $region8: #{tpu_custom_call.1} parent=1 // pred_region
      %14 = vsyncadd [#allocation3], 0
      %s16 = sshll.u32 %s1, 4
      %s17 = int_to_ptr.hbm [resolvable:$true] %s16
      %s18 = sshll.u32 [#allocation2], 4
      %s19 = int_to_ptr.vmem [resolvable:$true] %s18
      %21 = dma.hbm_to_vmem [thread:$0]  %s17, 256, %s19, [#allocation3]
    $region9: #{tpu_custom_call.1} parent=1 // pred_fallthru
      _
    // Predicated region
    $region10: #{tpu_custom_call.1} parent=1 // pred_check
      _
    $region11: #{tpu_custom_call.1} parent=1 // pred_check_branch
      %23 = sbr.rel (0) target = $region13
    $region12: #{tpu_custom_call.1} parent=1 // pred_region
      %25 = dma.done [#allocation3], 256
    $region13: #{tpu_custom_call.1} parent=1 // pred_fallthru
      _
    %v26 = vld [vmem:[#allocation2] sm:$0xff]
    %v27 = vld [vmem:[#allocation2 + $0x8] sm:$0xff]
    %v28 = vld [vmem:[%s0] sm:$0xff]
    %30 = vset.pattern.permute.xlu0 0
    %31 = vperm.xlu0 %30, %v28
    %v32 = vpop.permute.xlu0 %31
    %v34 = vmul.f32 %v26, %v32
    %v35 = vmul.f32 %v27, %v32
    %36 = vst [vmem:[#allocation5] sm:$0xff] %v34
    %37 = vst [vmem:[#allocation5 + $0x8] sm:$0xff] %v35
    // Predicated region
    $region14: #{tpu_custom_call.1} parent=1 // pred_check
      _
    $region15: #{tpu_custom_call.1} parent=1 // pred_check_branch
      %39 = sbr.rel (0) target = $region17
    $region16: #{tpu_custom_call.1} parent=1 // pred_region
      %41 = vsyncadd [#allocation4], 0
      %s43 = sshll.u32 [#allocation5], 4
      %s44 = int_to_ptr.vmem [resolvable:$true] %s43
      %s45 = sshll.u32 %s2, 4
      %s46 = int_to_ptr.hbm [resolvable:$true] %s45
      %48 = dma.vmem_to_hbm [thread:$0]  %s44, 256, %s46, [#allocation4]
    $region17: #{tpu_custom_call.1} parent=1 // pred_fallthru
      _
    // Predicated region
    $region18: #{tpu_custom_call.1} parent=1 // pred_check
      _
    $region19: #{tpu_custom_call.1} parent=1 // pred_check_branch
      %50 = sbr.rel (0) target = $region21
    $region20: #{tpu_custom_call.1} parent=1 // pred_region
      %52 = dma.done [#allocation4], 256
    $region21: #{tpu_custom_call.1} parent=1 // pred_fallthru
      _
    %53 = vsyncpa [#allocation3], 1
    %54 = vsyncpa [#allocation4], 1

</llo_original>
